<compile_context>
chip_gen: v6e
topology: v6e:2x2x1
jax: 0.10.0
libtpu: 0.0.40
codegen_flags: <defaults>
</compile_context>

<pallas_src>
import functools

import jax
import jax.numpy as jnp
from jax.experimental import pallas as pl
from jax.experimental.pallas import tpu as pltpu


# ---------------------------------------------------------------------------
# Kernel helpers
# ---------------------------------------------------------------------------
def _layernorm(x, gamma, beta, eps=1e-5):
    mu = jnp.mean(x, axis=-1, keepdims=True)
    var = jnp.mean(jnp.square(x - mu), axis=-1, keepdims=True)
    return (x - mu) * jax.lax.rsqrt(var + eps) * gamma + beta


# vector-pack row indices (rows of the [11, S] vec_params input)
_B_MN, _G_MN, _BE_MN = 0, 1, 2
_B_I1, _G_I1, _BE_I1 = 3, 4, 5
_B_I2 = 6
_G_PREV, _BE_PREV = 7, 8
_G_POST, _BE_POST = 9, 10
_NUM_VECS = 11


# ---------------------------------------------------------------------------
# Pallas kernels
# ---------------------------------------------------------------------------
def _trans_kernel(latent_ref, content_ref, style_ref,
                  w_pack_ref, w_hc_ref, vec_ref, b_hc_ref,
                  out_ref, *, N, S, E, C, H):
    # ---- hoisted parameter loads ------------------------------------------
    vec = vec_ref[...]                              # [11, S]
    b_mn, g_mn, be_mn = vec[_B_MN:_B_MN + 1], vec[_G_MN:_G_MN + 1], vec[_BE_MN:_BE_MN + 1]
    b_i1, g_i1, be_i1 = vec[_B_I1:_B_I1 + 1], vec[_G_I1:_G_I1 + 1], vec[_BE_I1:_BE_I1 + 1]
    b_i2 = vec[_B_I2:_B_I2 + 1]
    g_prev, be_prev = vec[_G_PREV:_G_PREV + 1], vec[_BE_PREV:_BE_PREV + 1]
    g_post, be_post = vec[_G_POST:_G_POST + 1], vec[_BE_POST:_BE_POST + 1]

    # packed small weights: [w_mn (N) | w_i1_noise (S) | w_i1_style (S) | w_i2 (S)]
    w_mn = w_pack_ref[0:N, :]
    w_i1_noise = w_pack_ref[N:N + S, :]
    w_i1_style = w_pack_ref[N + S:N + E, :]
    w_i2 = w_pack_ref[N + E:N + E + S, :]

    # fused h/c head, split along the row (input-feature) axis
    w_hc_content = w_hc_ref[0:C, :]                 # [C, 2H]
    w_hc_style = w_hc_ref[C:E, :]                   # [S, 2H]
    b_hc = b_hc_ref[...]                            # [1, 2H]

    latent = latent_ref[...]
    prev_content = content_ref[...]
    prev_style = style_ref[...]

    # ---- map_noise: Linear + LayerNorm ------------------------------------
    noise = jnp.dot(latent, w_mn, preferred_element_type=jnp.float32) + b_mn
    noise = _layernorm(noise, g_mn, be_mn)

    # ---- interaction_fc ('concat'): Linear(E->S), ReLU, LN, Linear(S->S) ---
    # cat([noise, prev_style]) @ w_i1  ==  noise @ w_i1[:S] + prev_style @ w_i1[S:]
    t = (jnp.dot(noise, w_i1_noise, preferred_element_type=jnp.float32)
         + jnp.dot(prev_style, w_i1_style, preferred_element_type=jnp.float32)
         + b_i1)
    t = jnp.maximum(t, 0.0)
    t = _layernorm(t, g_i1, be_i1)
    t = jnp.dot(t, w_i2, preferred_element_type=jnp.float32) + b_i2

    # ---- T_layer_norm > 0 branch + residual --------------------------------
    t = _layernorm(t, g_prev, be_prev)
    new_style = prev_style + t
    new_style = _layernorm(new_style, g_post, be_post)

    # ---- fused h/c heads on cat([prev_content, new_style]) -----------------
    hc = (jnp.dot(prev_content, w_hc_content, preferred_element_type=jnp.float32)
          + jnp.dot(new_style, w_hc_style, preferred_element_type=jnp.float32)
          + b_hc)                                   # [B, 2H]
    is_h = jax.lax.broadcasted_iota(jnp.int32, hc.shape, 1) < H
    hc = jnp.where(is_h, jnp.tanh(hc), hc)          # tanh only on the h half

    # ---- single packed output slab: [ new_style | h0 | c0 ] ----------------
    out_ref[:, :S] = new_style
    out_ref[:, S:] = hc


def _recons_kernel(content_ref, style_ref, w_hc_ref, b_hc_ref, out_ref,
                   *, C, E, H):
    w_hc_content = w_hc_ref[0:C, :]
    w_hc_style = w_hc_ref[C:E, :]
    b_hc = b_hc_ref[...]

    hc = (jnp.dot(content_ref[...], w_hc_content, preferred_element_type=jnp.float32)
          + jnp.dot(style_ref[...], w_hc_style, preferred_element_type=jnp.float32)
          + b_hc)                                   # [B, 2H]
    is_h = jax.lax.broadcasted_iota(jnp.int32, hc.shape, 1) < H
    out_ref[...] = jnp.where(is_h, jnp.tanh(hc), hc)


# ---------------------------------------------------------------------------
# Wrapper
# ---------------------------------------------------------------------------
def _vmem_specs(n):
    return [pl.BlockSpec(memory_space=pltpu.MemorySpace.VMEM) for _ in range(n)]


class LatentDecoderPallas:
    """JAX/Pallas port of LatentDecoder (dec_interaction='concat',
    T_layer_norm=1, dec_fc_layers=0)."""

    def __init__(self, embed_size, noise_size, dec_hidden_size, content_dim, key):
        assert embed_size == 2 * (embed_size - content_dim), \
            "'concat' interaction requires embed_size == 2 * style_size"
        self.embed_size = embed_size
        self.noise_size = noise_size
        self.dec_hidden_size = dec_hidden_size
        self.content_dim = content_dim
        self.style_size = embed_size - content_dim

        ks = list(jax.random.split(key, 16))
        S, E, N, H = self.style_size, embed_size, noise_size, dec_hidden_size

        def w(k, shape, fan_in):
            lim = 1.0 / jnp.sqrt(fan_in)
            return jax.random.uniform(k, shape, jnp.float32, -lim, lim)

        # Original (unpacked) parameters, [in, out] weights, [1, out] vectors.
        self.params = dict(
            w_mn=w(ks[0], (N, S), N), b_mn=w(ks[1], (1, S), N),
            g_mn=1.0 + 0.01 * w(ks[2], (1, S), S), be_mn=0.01 * w(ks[3], (1, S), S),
            w_i1=w(ks[4], (E, S), E), b_i1=w(ks[5], (1, S), E),
            g_i1=1.0 + 0.01 * w(ks[6], (1, S), S), be_i1=0.01 * w(ks[7], (1, S), S),
            w_i2=w(ks[8], (S, S), S), b_i2=w(ks[9], (1, S), S),
            g_prev=jnp.ones((1, S), jnp.float32), be_prev=jnp.zeros((1, S), jnp.float32),
            g_post=jnp.ones((1, S), jnp.float32), be_post=jnp.zeros((1, S), jnp.float32),
            w_h=w(ks[10], (E, H), E), b_h=w(ks[11], (1, H), E),
            w_c=w(ks[12], (E, H), E), b_c=w(ks[13], (1, H), E),
        )
        p = self.params

        # ---- host-side packing (fewer / wider kernel inputs) ----------------
        # small S-wide weights: [w_mn | w_i1 | w_i2] along rows -> [(N+E+S), S]
        self.w_pack = jnp.concatenate([p["w_mn"], p["w_i1"], p["w_i2"]], axis=0)
        # fused h/c head: [E, 2H], bias [1, 2H]
        self.w_hc = jnp.concatenate([p["w_h"], p["w_c"]], axis=1)
        self.b_hc = jnp.concatenate([p["b_h"], p["b_c"]], axis=1)
        # 11 S-wide vectors packed into one [11, S] slab (row order = _* indices)
        self.vec_params = jnp.concatenate(
            [p["b_mn"], p["g_mn"], p["be_mn"],
             p["b_i1"], p["g_i1"], p["be_i1"],
             p["b_i2"],
             p["g_prev"], p["be_prev"],
             p["g_post"], p["be_post"]], axis=0)
        assert self.vec_params.shape == (_NUM_VECS, S)

    @functools.partial(jax.jit, static_argnums=(0, 4))
    def __call__(self, latent_input, prev_content, prev_style, data_type="trans"):
        B = prev_style.shape[0]
        N, S, E = self.noise_size, self.style_size, self.embed_size
        C, H = self.content_dim, self.dec_hidden_size

        if data_type == "trans":
            kernel = functools.partial(_trans_kernel, N=N, S=S, E=E, C=C, H=H)
            args = (latent_input, prev_content, prev_style,
                    self.w_pack, self.w_hc, self.vec_params, self.b_hc)
            out = pl.pallas_call(
                kernel,
                out_shape=jax.ShapeDtypeStruct((B, S + 2 * H), jnp.float32),
                in_specs=_vmem_specs(len(args)),
                out_specs=pl.BlockSpec(memory_space=pltpu.MemorySpace.VMEM),
            )(*args)
            new_style = out[:, :S]
            h0 = out[:, S:S + H]
            c0 = out[:, S + H:]
        elif data_type == "recons":
            kernel = functools.partial(_recons_kernel, C=C, E=E, H=H)
            args = (prev_content, prev_style, self.w_hc, self.b_hc)
            hc = pl.pallas_call(
                kernel,
                out_shape=jax.ShapeDtypeStruct((B, 2 * H), jnp.float32),
                in_specs=_vmem_specs(len(args)),
                out_specs=pl.BlockSpec(memory_space=pltpu.MemorySpace.VMEM),
            )(*args)
            new_style = prev_style            # identity, no kernel copy needed
            h0 = hc[:, :H]
            c0 = hc[:, H:]
        else:
            raise ValueError(data_type)

        return {
            "new_style": new_style,
            "dec_embedding": (h0[None, ...], c0[None, ...]),  # unsqueeze(0)
        }


# ---------------------------------------------------------------------------
# Pure-JAX reference (for correctness check)
# ---------------------------------------------------------------------------
def _reference(model, latent, content, style, data_type="trans"):
    p = model.params

    def ln(x, g, b):
        mu = x.mean(-1, keepdims=True)
        var = ((x - mu) ** 2).mean(-1, keepdims=True)
        return (x - mu) / jnp.sqrt(var + 1e-5) * g + b

    if data_type == "trans":
        noise = ln(latent @ p["w_mn"] + p["b_mn"], p["g_mn"], p["be_mn"])
        concat = jnp.concatenate([noise, style], axis=1)
        t = jnp.maximum(concat @ p["w_i1"] + p["b_i1"], 0.0)
        t = ln(t, p["g_i1"], p["be_i1"])
        t = t @ p["w_i2"] + p["b_i2"]
        t = ln(t, p["g_prev"], p["be_prev"])
        new_style = ln(style + t, p["g_post"], p["be_post"])
    else:
        new_style = style
    new_code = jnp.concatenate([content, new_style], axis=1)
    h0 = jnp.tanh(new_code @ p["w_h"] + p["b_h"])
    c0 = new_code @ p["w_c"] + p["b_c"]
    return new_style, h0[None], c0[None]


# ---------------------------------------------------------------------------
if __name__ == "__main__":
    key = jax.random.PRNGKey(0)
    k_param, k_lat, k_con, k_sty = jax.random.split(key, 4)

    # Small shapes: embed=32, content_dim=16 -> style=16, noise=8, hidden=32, B=4
    embed_size, noise_size, dec_hidden_size, content_dim, batch = 32, 8, 32, 16, 4
    model = LatentDecoderPallas(embed_size, noise_size, dec_hidden_size,
                                content_dim, k_param)

    latent_input = jax.random.normal(k_lat, (batch, noise_size), jnp.float32)
    prev_content = jax.random.normal(k_con, (batch, content_dim), jnp.float32)
    prev_style = jax.random.normal(k_sty, (batch, embed_size - content_dim), jnp.float32)

    # ---- trans path ----
    out = model(latent_input, prev_content, prev_style, "trans")
    jax.block_until_ready(out)
    ref_style, ref_h0, ref_c0 = _reference(model, latent_input, prev_content,
                                           prev_style, "trans")
    assert jnp.allclose(out["new_style"], ref_style, atol=1e-5, rtol=1e-5)
    assert jnp.allclose(out["dec_embedding"][0], ref_h0, atol=1e-5, rtol=1e-5)
    assert jnp.allclose(out["dec_embedding"][1], ref_c0, atol=1e-5, rtol=1e-5)

    # ---- recons path ----
    out_r = model(latent_input, prev_content, prev_style, "recons")
    jax.block_until_ready(out_r)
    ref_style_r, ref_h0_r, ref_c0_r = _reference(model, latent_input, prev_content,
                                                 prev_style, "recons")
    assert jnp.allclose(out_r["new_style"], ref_style_r, atol=1e-5, rtol=1e-5)
    assert jnp.allclose(out_r["dec_embedding"][0], ref_h0_r, atol=1e-5, rtol=1e-5)
    assert jnp.allclose(out_r["dec_embedding"][1], ref_c0_r, atol=1e-5, rtol=1e-5)

    print("KERNEL_OK")
</pallas_src>

<mosaic_0001>
module attributes {stable_mosaic.version = 11 : i64} {
  func.func @_trans_kernel(%arg0: memref<4x8xf32, #tpu.memory_space<vmem>>, %arg1: memref<4x16xf32, #tpu.memory_space<vmem>>, %arg2: memref<4x16xf32, #tpu.memory_space<vmem>>, %arg3: memref<56x16xf32, #tpu.memory_space<vmem>>, %arg4: memref<32x64xf32, #tpu.memory_space<vmem>>, %arg5: memref<11x16xf32, #tpu.memory_space<vmem>>, %arg6: memref<1x64xf32, #tpu.memory_space<vmem>>, %arg7: memref<4x80xf32, #tpu.memory_space<vmem>>) attributes {dimension_semantics = [], scalar_prefetch = 0 : i64, scratch_operands = 0 : i64, tpu.core_type = #tpu.core_type<tc>} {
    %c0 = arith.constant 0 : index
    %c0_0 = arith.constant 0 : index
    %0 = vector.load %arg5[%c0, %c0_0] : memref<11x16xf32, #tpu.memory_space<vmem>>, vector<11x16xf32>
    %1 = vector.extract_strided_slice %0 {offsets = [0, 0], sizes = [1, 16], strides = [1, 1]} : vector<11x16xf32> to vector<1x16xf32>
    %2 = vector.extract_strided_slice %0 {offsets = [1, 0], sizes = [1, 16], strides = [1, 1]} : vector<11x16xf32> to vector<1x16xf32>
    %3 = vector.extract_strided_slice %0 {offsets = [2, 0], sizes = [1, 16], strides = [1, 1]} : vector<11x16xf32> to vector<1x16xf32>
    %4 = vector.extract_strided_slice %0 {offsets = [3, 0], sizes = [1, 16], strides = [1, 1]} : vector<11x16xf32> to vector<1x16xf32>
    %5 = vector.extract_strided_slice %0 {offsets = [4, 0], sizes = [1, 16], strides = [1, 1]} : vector<11x16xf32> to vector<1x16xf32>
    %6 = vector.extract_strided_slice %0 {offsets = [5, 0], sizes = [1, 16], strides = [1, 1]} : vector<11x16xf32> to vector<1x16xf32>
    %7 = vector.extract_strided_slice %0 {offsets = [6, 0], sizes = [1, 16], strides = [1, 1]} : vector<11x16xf32> to vector<1x16xf32>
    %8 = vector.extract_strided_slice %0 {offsets = [7, 0], sizes = [1, 16], strides = [1, 1]} : vector<11x16xf32> to vector<1x16xf32>
    %9 = vector.extract_strided_slice %0 {offsets = [8, 0], sizes = [1, 16], strides = [1, 1]} : vector<11x16xf32> to vector<1x16xf32>
    %10 = vector.extract_strided_slice %0 {offsets = [9, 0], sizes = [1, 16], strides = [1, 1]} : vector<11x16xf32> to vector<1x16xf32>
    %11 = vector.extract_strided_slice %0 {offsets = [10, 0], sizes = [1, 16], strides = [1, 1]} : vector<11x16xf32> to vector<1x16xf32>
    %c0_1 = arith.constant 0 : index
    %c0_2 = arith.constant 0 : index
    %12 = vector.load %arg3[%c0_1, %c0_2] : memref<56x16xf32, #tpu.memory_space<vmem>>, vector<8x16xf32>
    %c8 = arith.constant 8 : index
    %c0_3 = arith.constant 0 : index
    %13 = vector.load %arg3[%c8, %c0_3] : memref<56x16xf32, #tpu.memory_space<vmem>>, vector<16x16xf32>
    %c24 = arith.constant 24 : index
    %c0_4 = arith.constant 0 : index
    %14 = vector.load %arg3[%c24, %c0_4] : memref<56x16xf32, #tpu.memory_space<vmem>>, vector<16x16xf32>
    %c40 = arith.constant 40 : index
    %c0_5 = arith.constant 0 : index
    %15 = vector.load %arg3[%c40, %c0_5] : memref<56x16xf32, #tpu.memory_space<vmem>>, vector<16x16xf32>
    %c0_6 = arith.constant 0 : index
    %c0_7 = arith.constant 0 : index
    %16 = vector.load %arg4[%c0_6, %c0_7] : memref<32x64xf32, #tpu.memory_space<vmem>>, vector<16x64xf32>
    %c16 = arith.constant 16 : index
    %c0_8 = arith.constant 0 : index
    %17 = vector.load %arg4[%c16, %c0_8] : memref<32x64xf32, #tpu.memory_space<vmem>>, vector<16x64xf32>
    %c0_9 = arith.constant 0 : index
    %c0_10 = arith.constant 0 : index
    %18 = vector.load %arg6[%c0_9, %c0_10] : memref<1x64xf32, #tpu.memory_space<vmem>>, vector<1x64xf32>
    %c0_11 = arith.constant 0 : index
    %c0_12 = arith.constant 0 : index
    %19 = vector.load %arg0[%c0_11, %c0_12] : memref<4x8xf32, #tpu.memory_space<vmem>>, vector<4x8xf32>
    %c0_13 = arith.constant 0 : index
    %c0_14 = arith.constant 0 : index
    %20 = vector.load %arg1[%c0_13, %c0_14] : memref<4x16xf32, #tpu.memory_space<vmem>>, vector<4x16xf32>
    %c0_15 = arith.constant 0 : index
    %c0_16 = arith.constant 0 : index
    %21 = vector.load %arg2[%c0_15, %c0_16] : memref<4x16xf32, #tpu.memory_space<vmem>>, vector<4x16xf32>
    %cst = arith.constant dense<0.000000e+00> : vector<4x16xf32>
    %22 = tpu.matmul %19, %12, %cst {dimension_numbers = #tpu.dot_dimension_numbers<[1], [0], [0], [1], [0, 0, 1, 1], [], []>} : vector<4x8xf32>, vector<8x16xf32>, vector<4x16xf32> -> vector<4x16xf32>
    %23 = vector.broadcast %1 : vector<1x16xf32> to vector<4x16xf32>
    %24 = arith.addf %22, %23 : vector<4x16xf32>
    %cst_17 = arith.constant dense<0.000000e+00> : vector<4xf32>
    %25 = vector.multi_reduction <add>, %24, %cst_17 [1] : vector<4x16xf32> to vector<4xf32>
    %26 = vector.shape_cast %25 : vector<4xf32> to vector<4x1xf32>
    %cst_18 = arith.constant 1.600000e+01 : f32
    %27 = vector.broadcast %cst_18 : f32 to vector<4x1xf32>
    %28 = arith.divf %26, %27 : vector<4x1xf32>
    %29 = vector.broadcast %28 : vector<4x1xf32> to vector<4x16xf32>
    %30 = arith.subf %24, %29 : vector<4x16xf32>
    %31 = arith.mulf %30, %30 : vector<4x16xf32>
    %cst_19 = arith.constant dense<0.000000e+00> : vector<4xf32>
    %32 = vector.multi_reduction <add>, %31, %cst_19 [1] : vector<4x16xf32> to vector<4xf32>
    %33 = vector.shape_cast %32 : vector<4xf32> to vector<4x1xf32>
    %cst_20 = arith.constant 1.600000e+01 : f32
    %34 = vector.broadcast %cst_20 : f32 to vector<4x1xf32>
    %35 = arith.divf %33, %34 : vector<4x1xf32>
    %36 = vector.broadcast %28 : vector<4x1xf32> to vector<4x16xf32>
    %37 = arith.subf %24, %36 : vector<4x16xf32>
    %cst_21 = arith.constant 9.99999974E-6 : f32
    %38 = vector.broadcast %cst_21 : f32 to vector<4x1xf32>
    %39 = arith.addf %35, %38 : vector<4x1xf32>
    %40 = math.rsqrt %39 : vector<4x1xf32>
    %41 = vector.broadcast %40 : vector<4x1xf32> to vector<4x16xf32>
    %42 = arith.mulf %37, %41 : vector<4x16xf32>
    %43 = vector.broadcast %2 : vector<1x16xf32> to vector<4x16xf32>
    %44 = arith.mulf %42, %43 : vector<4x16xf32>
    %45 = vector.broadcast %3 : vector<1x16xf32> to vector<4x16xf32>
    %46 = arith.addf %44, %45 : vector<4x16xf32>
    %cst_22 = arith.constant dense<0.000000e+00> : vector<4x16xf32>
    %47 = tpu.matmul %46, %13, %cst_22 {dimension_numbers = #tpu.dot_dimension_numbers<[1], [0], [0], [1], [0, 0, 1, 1], [], []>} : vector<4x16xf32>, vector<16x16xf32>, vector<4x16xf32> -> vector<4x16xf32>
    %cst_23 = arith.constant dense<0.000000e+00> : vector<4x16xf32>
    %48 = tpu.matmul %21, %14, %cst_23 {dimension_numbers = #tpu.dot_dimension_numbers<[1], [0], [0], [1], [0, 0, 1, 1], [], []>} : vector<4x16xf32>, vector<16x16xf32>, vector<4x16xf32> -> vector<4x16xf32>
    %49 = arith.addf %47, %48 : vector<4x16xf32>
    %50 = vector.broadcast %4 : vector<1x16xf32> to vector<4x16xf32>
    %51 = arith.addf %49, %50 : vector<4x16xf32>
    %cst_24 = arith.constant 0.000000e+00 : f32
    %52 = vector.broadcast %cst_24 : f32 to vector<4x16xf32>
    %53 = arith.maximumf %51, %52 : vector<4x16xf32>
    %cst_25 = arith.constant dense<0.000000e+00> : vector<4xf32>
    %54 = vector.multi_reduction <add>, %53, %cst_25 [1] : vector<4x16xf32> to vector<4xf32>
    %55 = vector.shape_cast %54 : vector<4xf32> to vector<4x1xf32>
    %cst_26 = arith.constant 1.600000e+01 : f32
    %56 = vector.broadcast %cst_26 : f32 to vector<4x1xf32>
    %57 = arith.divf %55, %56 : vector<4x1xf32>
    %58 = vector.broadcast %57 : vector<4x1xf32> to vector<4x16xf32>
    %59 = arith.subf %53, %58 : vector<4x16xf32>
    %60 = arith.mulf %59, %59 : vector<4x16xf32>
    %cst_27 = arith.constant dense<0.000000e+00> : vector<4xf32>
    %61 = vector.multi_reduction <add>, %60, %cst_27 [1] : vector<4x16xf32> to vector<4xf32>
    %62 = vector.shape_cast %61 : vector<4xf32> to vector<4x1xf32>
    %cst_28 = arith.constant 1.600000e+01 : f32
    %63 = vector.broadcast %cst_28 : f32 to vector<4x1xf32>
    %64 = arith.divf %62, %63 : vector<4x1xf32>
    %65 = vector.broadcast %57 : vector<4x1xf32> to vector<4x16xf32>
    %66 = arith.subf %53, %65 : vector<4x16xf32>
    %cst_29 = arith.constant 9.99999974E-6 : f32
    %67 = vector.broadcast %cst_29 : f32 to vector<4x1xf32>
    %68 = arith.addf %64, %67 : vector<4x1xf32>
    %69 = math.rsqrt %68 : vector<4x1xf32>
    %70 = vector.broadcast %69 : vector<4x1xf32> to vector<4x16xf32>
    %71 = arith.mulf %66, %70 : vector<4x16xf32>
    %72 = vector.broadcast %5 : vector<1x16xf32> to vector<4x16xf32>
    %73 = arith.mulf %71, %72 : vector<4x16xf32>
    %74 = vector.broadcast %6 : vector<1x16xf32> to vector<4x16xf32>
    %75 = arith.addf %73, %74 : vector<4x16xf32>
    %cst_30 = arith.constant dense<0.000000e+00> : vector<4x16xf32>
    %76 = tpu.matmul %75, %15, %cst_30 {dimension_numbers = #tpu.dot_dimension_numbers<[1], [0], [0], [1], [0, 0, 1, 1], [], []>} : vector<4x16xf32>, vector<16x16xf32>, vector<4x16xf32> -> vector<4x16xf32>
    %77 = vector.broadcast %7 : vector<1x16xf32> to vector<4x16xf32>
    %78 = arith.addf %76, %77 : vector<4x16xf32>
    %cst_31 = arith.constant dense<0.000000e+00> : vector<4xf32>
    %79 = vector.multi_reduction <add>, %78, %cst_31 [1] : vector<4x16xf32> to vector<4xf32>
    %80 = vector.shape_cast %79 : vector<4xf32> to vector<4x1xf32>
    %cst_32 = arith.constant 1.600000e+01 : f32
    %81 = vector.broadcast %cst_32 : f32 to vector<4x1xf32>
    %82 = arith.divf %80, %81 : vector<4x1xf32>
    %83 = vector.broadcast %82 : vector<4x1xf32> to vector<4x16xf32>
    %84 = arith.subf %78, %83 : vector<4x16xf32>
    %85 = arith.mulf %84, %84 : vector<4x16xf32>
    %cst_33 = arith.constant dense<0.000000e+00> : vector<4xf32>
    %86 = vector.multi_reduction <add>, %85, %cst_33 [1] : vector<4x16xf32> to vector<4xf32>
    %87 = vector.shape_cast %86 : vector<4xf32> to vector<4x1xf32>
    %cst_34 = arith.constant 1.600000e+01 : f32
    %88 = vector.broadcast %cst_34 : f32 to vector<4x1xf32>
    %89 = arith.divf %87, %88 : vector<4x1xf32>
    %90 = vector.broadcast %82 : vector<4x1xf32> to vector<4x16xf32>
    %91 = arith.subf %78, %90 : vector<4x16xf32>
    %cst_35 = arith.constant 9.99999974E-6 : f32
    %92 = vector.broadcast %cst_35 : f32 to vector<4x1xf32>
    %93 = arith.addf %89, %92 : vector<4x1xf32>
    %94 = math.rsqrt %93 : vector<4x1xf32>
    %95 = vector.broadcast %94 : vector<4x1xf32> to vector<4x16xf32>
    %96 = arith.mulf %91, %95 : vector<4x16xf32>
    %97 = vector.broadcast %8 : vector<1x16xf32> to vector<4x16xf32>
    %98 = arith.mulf %96, %97 : vector<4x16xf32>
    %99 = vector.broadcast %9 : vector<1x16xf32> to vector<4x16xf32>
    %100 = arith.addf %98, %99 : vector<4x16xf32>
    %101 = arith.addf %21, %100 : vector<4x16xf32>
    %cst_36 = arith.constant dense<0.000000e+00> : vector<4xf32>
    %102 = vector.multi_reduction <add>, %101, %cst_36 [1] : vector<4x16xf32> to vector<4xf32>
    %103 = vector.shape_cast %102 : vector<4xf32> to vector<4x1xf32>
    %cst_37 = arith.constant 1.600000e+01 : f32
    %104 = vector.broadcast %cst_37 : f32 to vector<4x1xf32>
    %105 = arith.divf %103, %104 : vector<4x1xf32>
    %106 = vector.broadcast %105 : vector<4x1xf32> to vector<4x16xf32>
    %107 = arith.subf %101, %106 : vector<4x16xf32>
    %108 = arith.mulf %107, %107 : vector<4x16xf32>
    %cst_38 = arith.constant dense<0.000000e+00> : vector<4xf32>
    %109 = vector.multi_reduction <add>, %108, %cst_38 [1] : vector<4x16xf32> to vector<4xf32>
    %110 = vector.shape_cast %109 : vector<4xf32> to vector<4x1xf32>
    %cst_39 = arith.constant 1.600000e+01 : f32
    %111 = vector.broadcast %cst_39 : f32 to vector<4x1xf32>
    %112 = arith.divf %110, %111 : vector<4x1xf32>
    %113 = vector.broadcast %105 : vector<4x1xf32> to vector<4x16xf32>
    %114 = arith.subf %101, %113 : vector<4x16xf32>
    %cst_40 = arith.constant 9.99999974E-6 : f32
    %115 = vector.broadcast %cst_40 : f32 to vector<4x1xf32>
    %116 = arith.addf %112, %115 : vector<4x1xf32>
    %117 = math.rsqrt %116 : vector<4x1xf32>
    %118 = vector.broadcast %117 : vector<4x1xf32> to vector<4x16xf32>
    %119 = arith.mulf %114, %118 : vector<4x16xf32>
    %120 = vector.broadcast %10 : vector<1x16xf32> to vector<4x16xf32>
    %121 = arith.mulf %119, %120 : vector<4x16xf32>
    %122 = vector.broadcast %11 : vector<1x16xf32> to vector<4x16xf32>
    %123 = arith.addf %121, %122 : vector<4x16xf32>
    %cst_41 = arith.constant dense<0.000000e+00> : vector<4x64xf32>
    %124 = tpu.matmul %20, %16, %cst_41 {dimension_numbers = #tpu.dot_dimension_numbers<[1], [0], [0], [1], [0, 0, 1, 1], [], []>} : vector<4x16xf32>, vector<16x64xf32>, vector<4x64xf32> -> vector<4x64xf32>
    %cst_42 = arith.constant dense<0.000000e+00> : vector<4x64xf32>
    %125 = tpu.matmul %123, %17, %cst_42 {dimension_numbers = #tpu.dot_dimension_numbers<[1], [0], [0], [1], [0, 0, 1, 1], [], []>} : vector<4x16xf32>, vector<16x64xf32>, vector<4x64xf32> -> vector<4x64xf32>
    %126 = arith.addf %124, %125 : vector<4x64xf32>
    %127 = vector.broadcast %18 : vector<1x64xf32> to vector<4x64xf32>
    %128 = arith.addf %126, %127 : vector<4x64xf32>
    %129 = tpu.iota {dimensions = array<i32: 1>} : vector<4x64xi32>
    %c32_i32 = arith.constant 32 : i32
    %130 = vector.broadcast %c32_i32 : i32 to vector<4x64xi32>
    %131 = arith.cmpi slt, %129, %130 : vector<4x64xi32>
    %132 = math.tanh %128 : vector<4x64xf32>
    %133 = arith.select %131, %132, %128 : vector<4x64xi1>, vector<4x64xf32>
    %c0_43 = arith.constant 0 : index
    %c0_44 = arith.constant 0 : index
    %134 = vector.load %arg7[%c0_43, %c0_44] : memref<4x80xf32, #tpu.memory_space<vmem>>, vector<4x16xf32>
    tpu.vector_store %arg7[%c0_43, %c0_44], %123 {strides = array<i32>} : memref<4x80xf32, #tpu.memory_space<vmem>>, vector<4x16xf32>,
    %c0_45 = arith.constant 0 : index
    %c16_46 = arith.constant 16 : index
    %135 = vector.load %arg7[%c0_45, %c16_46] : memref<4x80xf32, #tpu.memory_space<vmem>>, vector<4x64xf32>
    tpu.vector_store %arg7[%c0_45, %c16_46], %133 {strides = array<i32>} : memref<4x80xf32, #tpu.memory_space<vmem>>, vector<4x64xf32>,
    return
  }
}

</mosaic_0001>

<llo_original>
// kernel: a_call__.1
$region0: #{a_call__.1}
  #allocation0 [shape = 'u32[]', space=smem, size = 0x4, offset = 0x4, fixed_abs, tag = 'smem constant byte address 0x4 - core index']
  #allocation1 [shape = 'u32[144,128]{1,0:T(1,128)}', space=vmem, size = 0x12000, scoped, tag = 'internal scratch']
  %s0 = inlined_call_operand.hbm [shape: f32[4,8], index: 0, kind: input, shape index: {}]
  %s1 = inlined_call_operand.hbm [shape: f32[4,16], index: 1, kind: input, shape index: {}]
  %s2 = inlined_call_operand.hbm [shape: f32[4,16], index: 2, kind: input, shape index: {}]
  %s3 = inlined_call_operand.hbm [shape: f32[56,16], index: 3, kind: input, shape index: {}]
  %s4 = inlined_call_operand.hbm [shape: f32[32,64], index: 4, kind: input, shape index: {}]
  %s5 = inlined_call_operand.hbm [shape: f32[11,16], index: 5, kind: input, shape index: {}]
  %s6 = inlined_call_operand.vmem [shape: f32[1,64], index: 6, kind: input, shape index: {}]
  %s7 = inlined_call_operand.vmem [shape: f32[4,80], index: 7, kind: output, shape index: {}]
  %s8 = sld [smem:[#allocation0]]
  $region62: #{a_call__.1} parent=0
    _
  %s10 = ssub.s32 1, %s8
  %s11 = scalar_select 0, %s10, %s8
  $region1: #{a_call__.1} parent=0
    #allocation2 [shape = 'u8[2048]{0}', space=vmem, size = 0x800, scoped, tag = 'input window, operand 0, single buffered']
    #allocation3 [shape = 's32[1]{0}', space=sflag, size = 0x4, scoped, tag = 'scoped memory for a_call__.1']
    #allocation4 [shape = 'u8[2048]{0}', space=vmem, size = 0x800, scoped, tag = 'input window, operand 1, single buffered']
    #allocation5 [shape = 's32[1]{0}', space=sflag, size = 0x4, scoped, tag = 'scoped memory for a_call__.1']
    #allocation6 [shape = 'u8[2048]{0}', space=vmem, size = 0x800, scoped, tag = 'input window, operand 2, single buffered']
    #allocation7 [shape = 'u8[28672]{0}', space=vmem, size = 0x7000, scoped, tag = 'input window, operand 3, single buffered']
    #allocation8 [shape = 's32[1]{0}', space=sflag, size = 0x4, scoped, tag = 'scoped memory for a_call__.1']
    #allocation9 [shape = 'u8[16384]{0}', space=vmem, size = 0x4000, scoped, tag = 'input window, operand 4, single buffered']
    #allocation10 [shape = 'u8[8192]{0}', space=vmem, size = 0x2000, scoped, tag = 'input window, operand 5, single buffered']
    #allocation11 [shape = 's32[1]{0}', space=sflag, size = 0x4, scoped, tag = 'scoped memory for a_call__.1']
    %12 = vsyncpa [#allocation3], 0
    %13 = vsyncpa [#allocation5], 0
    %14 = vsyncpa [#allocation8], 0
    %15 = vsyncpa [#allocation11], 0
    // Predicated region
    $region2: #{a_call__.1} parent=1 // pred_check
      _
    $region3: #{a_call__.1} parent=1 // pred_check_branch
      %17 = sbr.rel (0) target = $region5
    $region4: #{a_call__.1} parent=1 // pred_region
      %s19 = ssub.s32 64, 64
      %20 = vsyncadd [#allocation3], %s19
      %s22 = sshll.u32 [#allocation2], 4
      %s23 = int_to_ptr.vmem [resolvable:$true] %s22
      %25 = dma.hbm_to_vmem [thread:$0]  %s0, 64, %s23, [#allocation3]
    $region5: #{a_call__.1} parent=1 // pred_fallthru
      _
    // Predicated region
    $region6: #{a_call__.1} parent=1 // pred_check
      _
    $region7: #{a_call__.1} parent=1 // pred_check_branch
      %27 = sbr.rel (0) target = $region9
    $region8: #{a_call__.1} parent=1 // pred_region
      %s29 = ssub.s32 64, 64
      %30 = vsyncadd [#allocation5], %s29
      %s32 = sshll.u32 [#allocation4], 4
      %s33 = int_to_ptr.vmem [resolvable:$true] %s32
      %35 = dma.hbm_to_vmem [thread:$0]  %s1, 64, %s33, [#allocation5]
    $region9: #{a_call__.1} parent=1 // pred_fallthru
      _
    // Predicated region
    $region10: #{a_call__.1} parent=1 // pred_check
      _
    $region11: #{a_call__.1} parent=1 // pred_check_branch
      %37 = sbr.rel (0) target = $region13
    $region12: #{a_call__.1} parent=1 // pred_region
      %s39 = ssub.s32 64, 64
      %40 = vsyncadd [#allocation5], %s39
      %s42 = sshll.u32 [#allocation6], 4
      %s43 = int_to_ptr.vmem [resolvable:$true] %s42
      %45 = dma.hbm_to_vmem [thread:$0]  %s2, 64, %s43, [#allocation5]
    $region13: #{a_call__.1} parent=1 // pred_fallthru
      _
    // Predicated region
    $region14: #{a_call__.1} parent=1 // pred_check
      _
    $region15: #{a_call__.1} parent=1 // pred_check_branch
      %47 = sbr.rel (0) target = $region17
    $region16: #{a_call__.1} parent=1 // pred_region
      %s49 = ssub.s32 896, 896
      %50 = vsyncadd [#allocation8], %s49
      %s51 = sshll.u32 [#allocation7], 4
      %s52 = int_to_ptr.vmem [resolvable:$true] %s51
      %57 = dma.hbm_to_vmem [thread:$0]  %s3, 896, %s52, [#allocation8], 128, 128, 8
    $region17: #{a_call__.1} parent=1 // pred_fallthru
      _
    // Predicated region
    $region18: #{a_call__.1} parent=1 // pred_check
      _
    $region19: #{a_call__.1} parent=1 // pred_check_branch
      %59 = sbr.rel (0) target = $region21
    $region20: #{a_call__.1} parent=1 // pred_region
      %s61 = ssub.s32 512, 512
      %62 = vsyncadd [#allocation8], %s61
      %s63 = sshll.u32 [#allocation9], 4
      %s64 = int_to_ptr.vmem [resolvable:$true] %s63
      %69 = dma.hbm_to_vmem [thread:$0]  %s4, 512, %s64, [#allocation8], 128, 128, 8
    $region21: #{a_call__.1} parent=1 // pred_fallthru
      _
    // Predicated region
    $region22: #{a_call__.1} parent=1 // pred_check
      _
    $region23: #{a_call__.1} parent=1 // pred_check_branch
      %71 = sbr.rel (0) target = $region25
    $region24: #{a_call__.1} parent=1 // pred_region
      %s73 = ssub.s32 256, 256
      %74 = vsyncadd [#allocation11], %s73
      %s75 = sshll.u32 [#allocation10], 4
      %s76 = int_to_ptr.vmem [resolvable:$true] %s75
      %81 = dma.hbm_to_vmem [thread:$0]  %s5, 256, %s76, [#allocation11], 128, 128, 8
    $region25: #{a_call__.1} parent=1 // pred_fallthru
      _
    // Predicated region
    $region26: #{a_call__.1} parent=1 // pred_check
      _
    $region27: #{a_call__.1} parent=1 // pred_check_branch
      %83 = sbr.rel (0) target = $region29
    $region28: #{a_call__.1} parent=1 // pred_region
      _
    $region29: #{a_call__.1} parent=1 // pred_fallthru
      _
    // Predicated region
    $region30: #{a_call__.1} parent=1 // pred_check
      _
    $region31: #{a_call__.1} parent=1 // pred_check_branch
      %85 = sbr.rel (0) target = $region33
    $region32: #{a_call__.1} parent=1 // pred_region
      %86 = dma.done [#allocation3], 64
    $region33: #{a_call__.1} parent=1 // pred_fallthru
      _
    // Predicated region
    $region34: #{a_call__.1} parent=1 // pred_check
      _
    $region35: #{a_call__.1} parent=1 // pred_check_branch
      %88 = sbr.rel (0) target = $region37
    $region36: #{a_call__.1} parent=1 // pred_region
      %89 = dma.done [#allocation5], 64
    $region37: #{a_call__.1} parent=1 // pred_fallthru
      _
    // Predicated region
    $region38: #{a_call__.1} parent=1 // pred_check
      _
    $region39: #{a_call__.1} parent=1 // pred_check_branch
      %91 = sbr.rel (0) target = $region41
    $region40: #{a_call__.1} parent=1 // pred_region
      %92 = dma.done [#allocation5], 64
    $region41: #{a_call__.1} parent=1 // pred_fallthru
      _
    // Predicated region
    $region42: #{a_call__.1} parent=1 // pred_check
      _
    $region43: #{a_call__.1} parent=1 // pred_check_branch
      %94 = sbr.rel (0) target = $region45
    $region44: #{a_call__.1} parent=1 // pred_region
      %95 = dma.done [#allocation8], 896
    $region45: #{a_call__.1} parent=1 // pred_fallthru
      _
    // Predicated region
    $region46: #{a_call__.1} parent=1 // pred_check
      _
    $region47: #{a_call__.1} parent=1 // pred_check_branch
      %97 = sbr.rel (0) target = $region49
    $region48: #{a_call__.1} parent=1 // pred_region
      %98 = dma.done [#allocation8], 512
    $region49: #{a_call__.1} parent=1 // pred_fallthru
      _
    // Predicated region
    $region50: #{a_call__.1} parent=1 // pred_check
      _
    $region51: #{a_call__.1} parent=1 // pred_check_branch
      %100 = sbr.rel (0) target = $region53
    $region52: #{a_call__.1} parent=1 // pred_region
      %101 = dma.done [#allocation11], 256
    $region53: #{a_call__.1} parent=1 // pred_fallthru
      _
    %v102 = vld [vmem:[#allocation10] sm:$0xff]
    %v103 = vld [vmem:[#allocation10 + $0x8] sm:$0x7]
    %v104 = vld [vmem:[#allocation7] sm:$0xff]
    %v105 = vld [vmem:[#allocation7 + $0x8] sm:$0xff]
    %v106 = vld [vmem:[#allocation7 + $0x10] sm:$0xff]
    %v107 = vld [vmem:[#allocation7 + $0x18] sm:$0xff]
    %v108 = vld [vmem:[#allocation7 + $0x20] sm:$0xff]
    %v109 = vld [vmem:[#allocation7 + $0x28] sm:$0xff]
    %v110 = vld [vmem:[#allocation7 + $0x30] sm:$0xff]
    %v111 = vld [vmem:[#allocation9] sm:$0xff]
    %v112 = vld [vmem:[#allocation9 + $0x8] sm:$0xff]
    %v113 = vld [vmem:[#allocation9 + $0x10] sm:$0xff]
    %v114 = vld [vmem:[#allocation9 + $0x18] sm:$0xff]
    %v115 = vld [vmem:[%s6] sm:$0x1]
    %v116 = vld [vmem:[#allocation2] sm:$0xf]
    %v117 = vld [vmem:[#allocation4] sm:$0xf]
    %v118 = vld [vmem:[#allocation6] sm:$0xf]
    %v119 = vlaneseq
    %v120 = vshrl.u32 %v119, 7
    %v121 = vsub.s32 0, %v120
    %v122 = vrot.slane %v102, %v121
    %vm123 = vcmask 64512
    %v125 = vsel %vm123, %v116, 0
    %127 = vmatprep.subr.mxu0 0.0
    %128 = vmatpush1.msra.mxu0 0.0
    %129 = vmatprep.subr.mxu0 0.0
    %130 = vmatpush1.msra.mxu0 0.0
    %131 = vmatprep.subr.mxu0 0.0
    %132 = vmatpush1.msra.mxu0 0.0
    %133 = vmatprep.subr.mxu0 0.0
    %134 = vmatpush1.msra.mxu0 0.0
    %135 = vmatprep.subr.mxu0 0.0
    %136 = vmatpush1.msra.mxu0 0.0
    %137 = vmatprep.subr.mxu0 0.0
    %138 = vmatpush1.msra.mxu0 0.0
    %139 = vmatprep.subr.mxu0 0.0
    %140 = vmatpush1.msra.mxu0 0.0
    %141 = vmatprep.subr.mxu0 0.0
    %142 = vmatpush1.msra.mxu0 0.0
    %143 = vmatprep.subr.mxu0 0.0
    %144 = vmatpush1.msra.mxu0 0.0
    %145 = vmatprep.subr.mxu0 0.0
    %146 = vmatpush1.msra.mxu0 0.0
    %147 = vmatprep.subr.mxu0 0.0
    %148 = vmatpush1.msra.mxu0 0.0
    %149 = vmatprep.subr.mxu0 0.0
    %150 = vmatpush1.msra.mxu0 0.0
    %151 = vmatprep.subr.mxu0 0.0
    %152 = vmatpush1.msra.mxu0 0.0
    %153 = vmatprep.subr.mxu0 0.0
    %154 = vmatpush1.msra.mxu0 0.0
    %155 = vmatprep.subr.mxu0 0.0
    %156 = vmatpush1.msra.mxu0 0.0
    %157 = vmatprep.subr.mxu0 0.0
    %158 = vmatpush1.msra.mxu0 %v104
    %159 = vmatprep.subr.mxu0 0.0
    %160 = vmatpush2.msra.mxu0 0.0
    %161 = vmatprep.subr.mxu0 0.0
    %162 = vmatpush2.msra.mxu0 0.0
    %163 = vmatprep.subr.mxu0 0.0
    %164 = vmatpush2.msra.mxu0 0.0
    %165 = vmatprep.subr.mxu0 0.0
    %166 = vmatpush2.msra.mxu0 0.0
    %167 = vmatprep.subr.mxu0 0.0
    %168 = vmatpush2.msra.mxu0 0.0
    %169 = vmatprep.subr.mxu0 0.0
    %170 = vmatpush2.msra.mxu0 0.0
    %171 = vmatprep.subr.mxu0 0.0
    %172 = vmatpush2.msra.mxu0 0.0
    %173 = vmatprep.subr.mxu0 0.0
    %174 = vmatpush2.msra.mxu0 0.0
    %175 = vmatprep.subr.mxu0 0.0
    %176 = vmatpush2.msra.mxu0 0.0
    %177 = vmatprep.subr.mxu0 0.0
    %178 = vmatpush2.msra.mxu0 0.0
    %179 = vmatprep.subr.mxu0 0.0
    %180 = vmatpush2.msra.mxu0 0.0
    %181 = vmatprep.subr.mxu0 0.0
    %182 = vmatpush2.msra.mxu0 0.0
    %183 = vmatprep.subr.mxu0 0.0
    %184 = vmatpush2.msra.mxu0 0.0
    %185 = vmatprep.subr.mxu0 0.0
    %186 = vmatpush2.msra.mxu0 0.0
    %187 = vmatprep.subr.mxu0 0.0
    %188 = vmatpush2.msra.mxu0 0.0
    %189 = vmatprep.subr.mxu0 0.0
    %190 = vmatpush2.msra.mxu0 0.0
    %191 = vmatprep.mubr.f32.mxu0 0.0
    %192 = vmatmul.mubr.f32.gmra.mxu0 %v125
    %v193 = vpop.f32.mrf.mxu0
    %v194 = vadd.f32 %v122, %v193
    %v195 = vpop.f32.mrf.mxu0
    %196 = vdwg.mxu0
    %vm197 = vcmask 125952
    %v198 = vsel %vm197, %v194, 0.0
    %199 = vadd.xlane.f32.xlu0 %v198
    %v200 = vpop.xlane.xlu0 %199
    %v201 = vrcp.pop 16.0
    %v202 = vmul.f32 %v200, %v201
    %v203 = vsub.f32 %v194, %v202
    %v204 = vmul.f32 %v203, %v203
    %v205 = vsel %vm197, %v204, 0.0
    %206 = vadd.xlane.f32.xlu0 %v205
    %v207 = vpop.xlane.xlu0 %206
    %v208 = vmul.f32 %v207, %v201
    %v209 = vadd.f32 %v208, 1e-05
    %v210 = vrsqrt.pop %v209
    %v211 = vmul.f32 %v203, %v210
    %v212 = vlaneseq
    %v213 = vshrl.u32 %v212, 7
    %v214 = vsub.s32 1, %v213
    %v215 = vrot.slane %v102, %v214
    %v216 = vmul.f32 %v211, %v215
    %v217 = vlaneseq
    %v218 = vshrl.u32 %v217, 7
    %v219 = vsub.s32 2, %v218
    %v220 = vrot.slane %v102, %v219
    %v221 = vadd.f32 %v216, %v220
    %vm222 = vcmask 130048
    %v224 = vsel %vm222, %v118, 0
    %226 = vmatprep.subr.mxu0 0.0
    %227 = vmatpush1.msra.mxu0 0.0
    %228 = vmatprep.subr.mxu0 0.0
    %229 = vmatpush1.msra.mxu0 0.0
    %230 = vmatprep.subr.mxu0 0.0
    %231 = vmatpush1.msra.mxu0 0.0
    %232 = vmatprep.subr.mxu0 0.0
    %233 = vmatpush1.msra.mxu0 0.0
    %234 = vmatprep.subr.mxu0 0.0
    %235 = vmatpush1.msra.mxu0 0.0
    %236 = vmatprep.subr.mxu0 0.0
    %237 = vmatpush1.msra.mxu0 0.0
    %238 = vmatprep.subr.mxu0 0.0
    %239 = vmatpush1.msra.mxu0 0.0
    %240 = vmatprep.subr.mxu0 0.0
    %241 = vmatpush1.msra.mxu0 0.0
    %242 = vmatprep.subr.mxu0 0.0
    %243 = vmatpush1.msra.mxu0 0.0
    %244 = vmatprep.subr.mxu0 0.0
    %245 = vmatpush1.msra.mxu0 0.0
    %246 = vmatprep.subr.mxu0 0.0
    %247 = vmatpush1.msra.mxu0 0.0
    %248 = vmatprep.subr.mxu0 0.0
    %249 = vmatpush1.msra.mxu0 0.0
    %250 = vmatprep.subr.mxu0 0.0
    %251 = vmatpush1.msra.mxu0 0.0
    %252 = vmatprep.subr.mxu0 0.0
    %253 = vmatpush1.msra.mxu0 0.0
    %254 = vmatprep.subr.mxu0 0.0
    %255 = vmatpush1.msra.mxu0 %v108
    %256 = vmatprep.subr.mxu0 0.0
    %257 = vmatpush1.msra.mxu0 %v107
    %258 = vmatprep.subr.mxu0 0.0
    %259 = vmatpush2.msra.mxu0 0.0
    %260 = vmatprep.subr.mxu0 0.0
    %261 = vmatpush2.msra.mxu0 0.0
    %262 = vmatprep.subr.mxu0 0.0
    %263 = vmatpush2.msra.mxu0 0.0
    %264 = vmatprep.subr.mxu0 0.0
    %265 = vmatpush2.msra.mxu0 0.0
    %266 = vmatprep.subr.mxu0 0.0
    %267 = vmatpush2.msra.mxu0 0.0
    %268 = vmatprep.subr.mxu0 0.0
    %269 = vmatpush2.msra.mxu0 0.0
    %270 = vmatprep.subr.mxu0 0.0
    %271 = vmatpush2.msra.mxu0 0.0
    %272 = vmatprep.subr.mxu0 0.0
    %273 = vmatpush2.msra.mxu0 0.0
    %274 = vmatprep.subr.mxu0 0.0
    %275 = vmatpush2.msra.mxu0 0.0
    %276 = vmatprep.subr.mxu0 0.0
    %277 = vmatpush2.msra.mxu0 0.0
    %278 = vmatprep.subr.mxu0 0.0
    %279 = vmatpush2.msra.mxu0 0.0
    %280 = vmatprep.subr.mxu0 0.0
    %281 = vmatpush2.msra.mxu0 0.0
    %282 = vmatprep.subr.mxu0 0.0
    %283 = vmatpush2.msra.mxu0 0.0
    %284 = vmatprep.subr.mxu0 0.0
    %285 = vmatpush2.msra.mxu0 0.0
    %286 = vmatprep.subr.mxu0 0.0
    %287 = vmatpush2.msra.mxu0 0.0
    %288 = vmatprep.subr.mxu0 0.0
    %289 = vmatpush2.msra.mxu0 0.0
    %290 = vmatprep.mubr.f32.mxu0 0.0
    %291 = vmatmul.mubr.f32.gmra.mxu0 %v224
    %v292 = vpop.f32.mrf.mxu0
    %v293 = vadd.f32 0.0, %v292
    %v294 = vpop.f32.mrf.mxu0
    %295 = vdwg.mxu0
    %v297 = vsel %vm222, %v221, 0
    %299 = vmatprep.subr.mxu0 0.0
    %300 = vmatpush1.msra.mxu0 0.0
    %301 = vmatprep.subr.mxu0 0.0
    %302 = vmatpush1.msra.mxu0 0.0
    %303 = vmatprep.subr.mxu0 0.0
    %304 = vmatpush1.msra.mxu0 0.0
    %305 = vmatprep.subr.mxu0 0.0
    %306 = vmatpush1.msra.mxu0 0.0
    %307 = vmatprep.subr.mxu0 0.0
    %308 = vmatpush1.msra.mxu0 0.0
    %309 = vmatprep.subr.mxu0 0.0
    %310 = vmatpush1.msra.mxu0 0.0
    %311 = vmatprep.subr.mxu0 0.0
    %312 = vmatpush1.msra.mxu0 0.0
    %313 = vmatprep.subr.mxu0 0.0
    %314 = vmatpush1.msra.mxu0 0.0
    %315 = vmatprep.subr.mxu0 0.0
    %316 = vmatpush1.msra.mxu0 0.0
    %317 = vmatprep.subr.mxu0 0.0
    %318 = vmatpush1.msra.mxu0 0.0
    %319 = vmatprep.subr.mxu0 0.0
    %320 = vmatpush1.msra.mxu0 0.0
    %321 = vmatprep.subr.mxu0 0.0
    %322 = vmatpush1.msra.mxu0 0.0
    %323 = vmatprep.subr.mxu0 0.0
    %324 = vmatpush1.msra.mxu0 0.0
    %325 = vmatprep.subr.mxu0 0.0
    %326 = vmatpush1.msra.mxu0 0.0
    %327 = vmatprep.subr.mxu0 0.0
    %328 = vmatpush1.msra.mxu0 %v106
    %329 = vmatprep.subr.mxu0 0.0
    %330 = vmatpush1.msra.mxu0 %v105
    %331 = vmatprep.subr.mxu0 0.0
    %332 = vmatpush2.msra.mxu0 0.0
    %333 = vmatprep.subr.mxu0 0.0
    %334 = vmatpush2.msra.mxu0 0.0
    %335 = vmatprep.subr.mxu0 0.0
    %336 = vmatpush2.msra.mxu0 0.0
    %337 = vmatprep.subr.mxu0 0.0
    %338 = vmatpush2.msra.mxu0 0.0
    %339 = vmatprep.subr.mxu0 0.0
    %340 = vmatpush2.msra.mxu0 0.0
    %341 = vmatprep.subr.mxu0 0.0
    %342 = vmatpush2.msra.mxu0 0.0
    %343 = vmatprep.subr.mxu0 0.0
    %344 = vmatpush2.msra.mxu0 0.0
    %345 = vmatprep.subr.mxu0 0.0
    %346 = vmatpush2.msra.mxu0 0.0
    %347 = vmatprep.subr.mxu0 0.0
    %348 = vmatpush2.msra.mxu0 0.0
    %349 = vmatprep.subr.mxu0 0.0
    %350 = vmatpush2.msra.mxu0 0.0
    %351 = vmatprep.subr.mxu0 0.0
    %352 = vmatpush2.msra.mxu0 0.0
    %353 = vmatprep.subr.mxu0 0.0
    %354 = vmatpush2.msra.mxu0 0.0
    %355 = vmatprep.subr.mxu0 0.0
    %356 = vmatpush2.msra.mxu0 0.0
    %357 = vmatprep.subr.mxu0 0.0
    %358 = vmatpush2.msra.mxu0 0.0
    %359 = vmatprep.subr.mxu0 0.0
    %360 = vmatpush2.msra.mxu0 0.0
    %361 = vmatprep.subr.mxu0 0.0
    %362 = vmatpush2.msra.mxu0 0.0
    %363 = vmatprep.mubr.f32.mxu0 0.0
    %364 = vmatmul.mubr.f32.gmra.mxu0 %v297
    %v365 = vpop.f32.mrf.mxu0
    %v366 = vadd.f32 %v293, %v365
    %v367 = vpop.f32.mrf.mxu0
    %368 = vdwg.mxu0
    %v369 = vlaneseq
    %v370 = vshrl.u32 %v369, 7
    %v371 = vsub.s32 3, %v370
    %v372 = vrot.slane %v102, %v371
    %v373 = vadd.f32 %v366, %v372
    %v374 = vmax.f32 %v373, 0.0
    %v375 = vsel %vm197, %v374, 0.0
    %376 = vadd.xlane.f32.xlu0 %v375
    %v377 = vpop.xlane.xlu0 %376
    %v378 = vmul.f32 %v377, %v201
    %v379 = vsub.f32 %v374, %v378
    %v380 = vmul.f32 %v379, %v379
    %v381 = vsel %vm197, %v380, 0.0
    %382 = vadd.xlane.f32.xlu0 %v381
    %v383 = vpop.xlane.xlu0 %382
    %v384 = vmul.f32 %v383, %v201
    %v385 = vadd.f32 %v384, 1e-05
    %v386 = vrsqrt.pop %v385
    %v387 = vmul.f32 %v379, %v386
    %v388 = vlaneseq
    %v389 = vshrl.u32 %v388, 7
    %v390 = vsub.s32 4, %v389
    %v391 = vrot.slane %v102, %v390
    %v392 = vmul.f32 %v387, %v391
    %v393 = vlaneseq
    %v394 = vshrl.u32 %v393, 7
    %v395 = vsub.s32 5, %v394
    %v396 = vrot.slane %v102, %v395
    %v397 = vadd.f32 %v392, %v396
    %v398 = vlaneseq
    %v399 = vshrl.u32 %v398, 7
    %v400 = vsub.s32 6, %v399
    %v401 = vrot.slane %v102, %v400
    %v403 = vsel %vm222, %v397, 0
    %405 = vmatprep.subr.mxu0 0.0
    %406 = vmatpush1.msra.mxu0 0.0
    %407 = vmatprep.subr.mxu0 0.0
    %408 = vmatpush1.msra.mxu0 0.0
    %409 = vmatprep.subr.mxu0 0.0
    %410 = vmatpush1.msra.mxu0 0.0
    %411 = vmatprep.subr.mxu0 0.0
    %412 = vmatpush1.msra.mxu0 0.0
    %413 = vmatprep.subr.mxu0 0.0
    %414 = vmatpush1.msra.mxu0 0.0
    %415 = vmatprep.subr.mxu0 0.0
    %416 = vmatpush1.msra.mxu0 0.0
    %417 = vmatprep.subr.mxu0 0.0
    %418 = vmatpush1.msra.mxu0 0.0
    %419 = vmatprep.subr.mxu0 0.0
    %420 = vmatpush1.msra.mxu0 0.0
    %421 = vmatprep.subr.mxu0 0.0
    %422 = vmatpush1.msra.mxu0 0.0
    %423 = vmatprep.subr.mxu0 0.0
    %424 = vmatpush1.msra.mxu0 0.0
    %425 = vmatprep.subr.mxu0 0.0
    %426 = vmatpush1.msra.mxu0 0.0
    %427 = vmatprep.subr.mxu0 0.0
    %428 = vmatpush1.msra.mxu0 0.0
    %429 = vmatprep.subr.mxu0 0.0
    %430 = vmatpush1.msra.mxu0 0.0
    %431 = vmatprep.subr.mxu0 0.0
    %432 = vmatpush1.msra.mxu0 0.0
    %433 = vmatprep.subr.mxu0 0.0
    %434 = vmatpush1.msra.mxu0 %v110
    %435 = vmatprep.subr.mxu0 0.0
    %436 = vmatpush1.msra.mxu0 %v109
    %437 = vmatprep.subr.mxu0 0.0
    %438 = vmatpush2.msra.mxu0 0.0
    %439 = vmatprep.subr.mxu0 0.0
    %440 = vmatpush2.msra.mxu0 0.0
    %441 = vmatprep.subr.mxu0 0.0
    %442 = vmatpush2.msra.mxu0 0.0
    %443 = vmatprep.subr.mxu0 0.0
    %444 = vmatpush2.msra.mxu0 0.0
    %445 = vmatprep.subr.mxu0 0.0
    %446 = vmatpush2.msra.mxu0 0.0
    %447 = vmatprep.subr.mxu0 0.0
    %448 = vmatpush2.msra.mxu0 0.0
    %449 = vmatprep.subr.mxu0 0.0
    %450 = vmatpush2.msra.mxu0 0.0
    %451 = vmatprep.subr.mxu0 0.0
    %452 = vmatpush2.msra.mxu0 0.0
    %453 = vmatprep.subr.mxu0 0.0
    %454 = vmatpush2.msra.mxu0 0.0
    %455 = vmatprep.subr.mxu0 0.0
    %456 = vmatpush2.msra.mxu0 0.0
    %457 = vmatprep.subr.mxu0 0.0
    %458 = vmatpush2.msra.mxu0 0.0
    %459 = vmatprep.subr.mxu0 0.0
    %460 = vmatpush2.msra.mxu0 0.0
    %461 = vmatprep.subr.mxu0 0.0
    %462 = vmatpush2.msra.mxu0 0.0
    %463 = vmatprep.subr.mxu0 0.0
    %464 = vmatpush2.msra.mxu0 0.0
    %465 = vmatprep.subr.mxu0 0.0
    %466 = vmatpush2.msra.mxu0 0.0
    %467 = vmatprep.subr.mxu0 0.0
    %468 = vmatpush2.msra.mxu0 0.0
    %469 = vmatprep.mubr.f32.mxu0 0.0
    %470 = vmatmul.mubr.f32.gmra.mxu0 %v403
    %v471 = vpop.f32.mrf.mxu0
    %v472 = vadd.f32 %v401, %v471
    %v473 = vpop.f32.mrf.mxu0
    %474 = vdwg.mxu0
    %v475 = vsel %vm197, %v472, 0.0
    %476 = vadd.xlane.f32.xlu0 %v475
    %v477 = vpop.xlane.xlu0 %476
    %v478 = vmul.f32 %v477, %v201
    %v479 = vsub.f32 %v472, %v478
    %v480 = vmul.f32 %v479, %v479
    %v481 = vsel %vm197, %v480, 0.0
    %482 = vadd.xlane.f32.xlu0 %v481
    %v483 = vpop.xlane.xlu0 %482
    %v484 = vmul.f32 %v483, %v201
    %v485 = vadd.f32 %v484, 1e-05
    %v486 = vrsqrt.pop %v485
    %v487 = vmul.f32 %v479, %v486
    %v488 = vlaneseq
    %v489 = vshrl.u32 %v488, 7
    %v490 = vsub.s32 7, %v489
    %v491 = vrot.slane %v102, %v490
    %v492 = vmul.f32 %v487, %v491
    %v493 = vlaneseq
    %v494 = vshrl.u32 %v493, 7
    %v495 = vsub.s32 0, %v494
    %v496 = vrot.slane %v103, %v495
    %v497 = vadd.f32 %v492, %v496
    %v498 = vadd.f32 %v118, %v497
    %v499 = vsel %vm197, %v498, 0.0
    %500 = vadd.xlane.f32.xlu0 %v499
    %v501 = vpop.xlane.xlu0 %500
    %v502 = vmul.f32 %v501, %v201
    %v503 = vsub.f32 %v498, %v502
    %v504 = vmul.f32 %v503, %v503
    %v505 = vsel %vm197, %v504, 0.0
    %506 = vadd.xlane.f32.xlu0 %v505
    %v507 = vpop.xlane.xlu0 %506
    %v508 = vmul.f32 %v507, %v201
    %v509 = vadd.f32 %v508, 1e-05
    %v510 = vrsqrt.pop %v509
    %v511 = vmul.f32 %v503, %v510
    %v512 = vlaneseq
    %v513 = vshrl.u32 %v512, 7
    %v514 = vsub.s32 1, %v513
    %v515 = vrot.slane %v103, %v514
    %v516 = vmul.f32 %v511, %v515
    %v517 = vlaneseq
    %v518 = vshrl.u32 %v517, 7
    %v519 = vsub.s32 2, %v518
    %v520 = vrot.slane %v103, %v519
    %v521 = vadd.f32 %v516, %v520
    %v523 = vsel %vm222, %v521, 0
    %525 = vmatprep.subr.mxu0 0.0
    %526 = vmatpush1.msra.mxu0 0.0
    %527 = vmatprep.subr.mxu0 0.0
    %528 = vmatpush1.msra.mxu0 0.0
    %529 = vmatprep.subr.mxu0 0.0
    %530 = vmatpush1.msra.mxu0 0.0
    %531 = vmatprep.subr.mxu0 0.0
    %532 = vmatpush1.msra.mxu0 0.0
    %533 = vmatprep.subr.mxu0 0.0
    %534 = vmatpush1.msra.mxu0 0.0
    %535 = vmatprep.subr.mxu0 0.0
    %536 = vmatpush1.msra.mxu0 0.0
    %537 = vmatprep.subr.mxu0 0.0
    %538 = vmatpush1.msra.mxu0 0.0
    %539 = vmatprep.subr.mxu0 0.0
    %540 = vmatpush1.msra.mxu0 0.0
    %541 = vmatprep.subr.mxu0 0.0
    %542 = vmatpush1.msra.mxu0 0.0
    %543 = vmatprep.subr.mxu0 0.0
    %544 = vmatpush1.msra.mxu0 0.0
    %545 = vmatprep.subr.mxu0 0.0
    %546 = vmatpush1.msra.mxu0 0.0
    %547 = vmatprep.subr.mxu0 0.0
    %548 = vmatpush1.msra.mxu0 0.0
    %549 = vmatprep.subr.mxu0 0.0
    %550 = vmatpush1.msra.mxu0 0.0
    %551 = vmatprep.subr.mxu0 0.0
    %552 = vmatpush1.msra.mxu0 0.0
    %553 = vmatprep.subr.mxu0 0.0
    %554 = vmatpush1.msra.mxu0 %v114
    %555 = vmatprep.subr.mxu0 0.0
    %556 = vmatpush1.msra.mxu0 %v113
    %557 = vmatprep.subr.mxu0 0.0
    %558 = vmatpush2.msra.mxu0 0.0
    %559 = vmatprep.subr.mxu0 0.0
    %560 = vmatpush2.msra.mxu0 0.0
    %561 = vmatprep.subr.mxu0 0.0
    %562 = vmatpush2.msra.mxu0 0.0
    %563 = vmatprep.subr.mxu0 0.0
    %564 = vmatpush2.msra.mxu0 0.0
    %565 = vmatprep.subr.mxu0 0.0
    %566 = vmatpush2.msra.mxu0 0.0
    %567 = vmatprep.subr.mxu0 0.0
    %568 = vmatpush2.msra.mxu0 0.0
    %569 = vmatprep.subr.mxu0 0.0
    %570 = vmatpush2.msra.mxu0 0.0
    %571 = vmatprep.subr.mxu0 0.0
    %572 = vmatpush2.msra.mxu0 0.0
    %573 = vmatprep.subr.mxu0 0.0
    %574 = vmatpush2.msra.mxu0 0.0
    %575 = vmatprep.subr.mxu0 0.0
    %576 = vmatpush2.msra.mxu0 0.0
    %577 = vmatprep.subr.mxu0 0.0
    %578 = vmatpush2.msra.mxu0 0.0
    %579 = vmatprep.subr.mxu0 0.0
    %580 = vmatpush2.msra.mxu0 0.0
    %581 = vmatprep.subr.mxu0 0.0
    %582 = vmatpush2.msra.mxu0 0.0
    %583 = vmatprep.subr.mxu0 0.0
    %584 = vmatpush2.msra.mxu0 0.0
    %585 = vmatprep.subr.mxu0 0.0
    %586 = vmatpush2.msra.mxu0 0.0
    %587 = vmatprep.subr.mxu0 0.0
    %588 = vmatpush2.msra.mxu0 0.0
    %589 = vmatprep.mubr.f32.mxu0 0.0
    %590 = vmatmul.mubr.f32.gmra.mxu0 %v523
    %v591 = vpop.f32.mrf.mxu0
    %v592 = vadd.f32 0.0, %v591
    %v593 = vpop.f32.mrf.mxu0
    %594 = vdwg.mxu0
    %v596 = vsel %vm222, %v117, 0
    %598 = vmatprep.subr.mxu0 0.0
    %599 = vmatpush1.msra.mxu0 0.0
    %600 = vmatprep.subr.mxu0 0.0
    %601 = vmatpush1.msra.mxu0 0.0
    %602 = vmatprep.subr.mxu0 0.0
    %603 = vmatpush1.msra.mxu0 0.0
    %604 = vmatprep.subr.mxu0 0.0
    %605 = vmatpush1.msra.mxu0 0.0
    %606 = vmatprep.subr.mxu0 0.0
    %607 = vmatpush1.msra.mxu0 0.0
    %608 = vmatprep.subr.mxu0 0.0
    %609 = vmatpush1.msra.mxu0 0.0
    %610 = vmatprep.subr.mxu0 0.0
    %611 = vmatpush1.msra.mxu0 0.0
    %612 = vmatprep.subr.mxu0 0.0
    %613 = vmatpush1.msra.mxu0 0.0
    %614 = vmatprep.subr.mxu0 0.0
    %615 = vmatpush1.msra.mxu0 0.0
    %616 = vmatprep.subr.mxu0 0.0
    %617 = vmatpush1.msra.mxu0 0.0
    %618 = vmatprep.subr.mxu0 0.0
    %619 = vmatpush1.msra.mxu0 0.0
    %620 = vmatprep.subr.mxu0 0.0
    %621 = vmatpush1.msra.mxu0 0.0
    %622 = vmatprep.subr.mxu0 0.0
    %623 = vmatpush1.msra.mxu0 0.0
    %624 = vmatprep.subr.mxu0 0.0
    %625 = vmatpush1.msra.mxu0 0.0
    %626 = vmatprep.subr.mxu0 0.0
    %627 = vmatpush1.msra.mxu0 %v112
    %628 = vmatprep.subr.mxu0 0.0
    %629 = vmatpush1.msra.mxu0 %v111
    %630 = vmatprep.subr.mxu0 0.0
    %631 = vmatpush2.msra.mxu0 0.0
    %632 = vmatprep.subr.mxu0 0.0
    %633 = vmatpush2.msra.mxu0 0.0
    %634 = vmatprep.subr.mxu0 0.0
    %635 = vmatpush2.msra.mxu0 0.0
    %636 = vmatprep.subr.mxu0 0.0
    %637 = vmatpush2.msra.mxu0 0.0
    %638 = vmatprep.subr.mxu0 0.0
    %639 = vmatpush2.msra.mxu0 0.0
    %640 = vmatprep.subr.mxu0 0.0
    %641 = vmatpush2.msra.mxu0 0.0
    %642 = vmatprep.subr.mxu0 0.0
    %643 = vmatpush2.msra.mxu0 0.0
    %644 = vmatprep.subr.mxu0 0.0
    %645 = vmatpush2.msra.mxu0 0.0
    %646 = vmatprep.subr.mxu0 0.0
    %647 = vmatpush2.msra.mxu0 0.0
    %648 = vmatprep.subr.mxu0 0.0
    %649 = vmatpush2.msra.mxu0 0.0
    %650 = vmatprep.subr.mxu0 0.0
    %651 = vmatpush2.msra.mxu0 0.0
    %652 = vmatprep.subr.mxu0 0.0
    %653 = vmatpush2.msra.mxu0 0.0
    %654 = vmatprep.subr.mxu0 0.0
    %655 = vmatpush2.msra.mxu0 0.0
    %656 = vmatprep.subr.mxu0 0.0
    %657 = vmatpush2.msra.mxu0 0.0
    %658 = vmatprep.subr.mxu0 0.0
    %659 = vmatpush2.msra.mxu0 0.0
    %660 = vmatprep.subr.mxu0 0.0
    %661 = vmatpush2.msra.mxu0 0.0
    %662 = vmatprep.mubr.f32.mxu0 0.0
    %663 = vmatmul.mubr.f32.gmra.mxu0 %v596
    %v664 = vpop.f32.mrf.mxu0
    %v665 = vadd.f32 %v592, %v664
    %v666 = vpop.f32.mrf.mxu0
    %667 = vdwg.mxu0
    %v669 = vlaneseq
    %v670 = vshrl.u32 %v669, 7
    %v671 = vsub.s32 0, %v670
    %v672 = vrot.slane %v115, %v671
    %v674 = vadd.f32 %v665, %v672
    %v675 = vlaneseq
    %v676 = vand.u32 %v675, 127
    %vm677 = vcmp.lt.s32.totalorder %v676, 32
    %v678 = vtanh.pop %v674
    %v679 = vsel %vm677, %v678, %v674
    %680 = vst.msk [vmem:[%s7] sm:$0xf] %vm197, %v521
    %682 = vrot.lane.b32.xlu0 %v679, 16
    %v683 = vpop.permute.xlu0 %682
    %vm685 = vcmask 650368
    %686 = vst.msk [vmem:[%s7] sm:$0xf] %vm685, %v683
    // Predicated region
    $region54: #{a_call__.1} parent=1 // pred_check
      _
    $region55: #{a_call__.1} parent=1 // pred_check_branch
      %688 = sbr.rel (0) target = $region57
    $region56: #{a_call__.1} parent=1 // pred_region
      _
    $region57: #{a_call__.1} parent=1 // pred_fallthru
      _
    // Predicated region
    $region58: #{a_call__.1} parent=1 // pred_check
      _
    $region59: #{a_call__.1} parent=1 // pred_check_branch
      %690 = sbr.rel (0) target = $region61
    $region60: #{a_call__.1} parent=1 // pred_region
      _
    $region61: #{a_call__.1} parent=1 // pred_fallthru
      _
    %691 = vsyncpa [#allocation3], 1
    %692 = vsyncpa [#allocation5], 1
    %693 = vsyncpa [#allocation8], 1
    %694 = vsyncpa [#allocation11], 1

</llo_original>
